<compile_context>
chip_gen: v6e
topology: v6e:2x2x1
jax: 0.10.0
libtpu: 0.0.40
codegen_flags: <defaults>
</compile_context>

<pallas_src>
import functools

import jax
import jax.numpy as jnp
from jax.experimental import pallas as pl
from jax.experimental.pallas import tpu as pltpu


def _round_up(x, m):
    return (x + m - 1) // m * m


def dual_encoder_kernel(hw_ref, hl_ref,
                        wdw_ref, bdw_ref,
                        wdl_ref, bdl_ref,
                        wf_ref, bf_ref,
                        out_ref,
                        z_ref):
    f32 = jnp.float32

    # Bottleneck activations z = [relu(hw@Wdw + bdw) | relu(hl@Wdl + bdl)]
    # computed once per row tile (first df tile) and cached in VMEM scratch.
    @pl.when(pl.program_id(1) == 0)
    def _():
        zw = jnp.dot(hw_ref[...], wdw_ref[...], preferred_element_type=f32)
        zw = jnp.maximum(zw + bdw_ref[...], 0.0)
        zl = jnp.dot(hl_ref[...], wdl_ref[...], preferred_element_type=f32)
        zl = jnp.maximum(zl + bdl_ref[...], 0.0)
        # Single lane-dense store of the full [tm, 2*bneck] block.
        z_ref[...] = jnp.concatenate([zw, zl], axis=-1).astype(z_ref.dtype)

    # Fused (up -> proj): one K = 2*bneck matmul per df tile.
    out = jnp.dot(z_ref[...], wf_ref[...], preferred_element_type=f32)
    out_ref[...] = (out + bf_ref[...]).astype(out_ref.dtype)


def init_linear_params(key, in_features, out_features, dtype=jnp.float32):
    """Deterministic init mimicking PyTorch nn.Linear defaults.
    Weight is returned already transposed to [in_features, out_features]."""
    kw, kb = jax.random.split(key)
    bound = 1.0 / jnp.sqrt(jnp.asarray(in_features, dtype))
    w = jax.random.uniform(kw, (in_features, out_features), dtype,
                           minval=-bound, maxval=bound)
    b = jax.random.uniform(kb, (1, out_features), dtype,
                           minval=-bound, maxval=bound)
    return w, b


def init_dual_encoder_params(key, dw, dl, df=512, bottleneck=64):
    """Raw per-layer parameters matching the PyTorch module structure."""
    keys = jax.random.split(key, 5)
    w_dw, b_dw = init_linear_params(keys[0], dw, bottleneck)      # ad_w.down
    w_uw, b_uw = init_linear_params(keys[1], bottleneck, dw)      # ad_w.up
    w_dl, b_dl = init_linear_params(keys[2], dl, bottleneck)      # ad_l.down
    w_ul, b_ul = init_linear_params(keys[3], bottleneck, dl)      # ad_l.up
    w_p, b_p = init_linear_params(keys[4], dw + dl, df)           # proj
    return dict(w_dw=w_dw, b_dw=b_dw, w_uw=w_uw, b_uw=b_uw,
                w_dl=w_dl, b_dl=b_dl, w_ul=w_ul, b_ul=b_ul,
                w_pw=w_p[:dw, :], w_pl=w_p[dw:, :], b_p=b_p)


def prepare_kernel_params(params, *, tn=256):
    """One-time host-side prep: fold up->proj into a single fused weight and
    zero-pad feature dims to lane multiples. Call once, reuse every forward."""
    dw, bneck = params["w_dw"].shape
    dl = params["w_dl"].shape[0]
    df = params["b_p"].shape[-1]

    dw_p = _round_up(dw, 128)
    dl_p = _round_up(dl, 128)
    df_p = _round_up(df, max(tn, 128))

    # proj(cat(up_w(zw), up_l(zl))) == zw @ (w_uw @ w_pw) + zl @ (w_ul @ w_pl)
    #                                  + (b_uw @ w_pw + b_ul @ w_pl + b_p)
    w_fw = params["w_uw"] @ params["w_pw"]                        # [bneck, df]
    w_fl = params["w_ul"] @ params["w_pl"]                        # [bneck, df]
    b_f = (params["b_uw"] @ params["w_pw"]
           + params["b_ul"] @ params["w_pl"]
           + params["b_p"])                                       # [1, df]
    w_f = jnp.concatenate([w_fw, w_fl], axis=0)                   # [2*bneck, df]

    return dict(
        w_dw=jnp.pad(params["w_dw"], ((0, dw_p - dw), (0, 0))),
        b_dw=params["b_dw"],
        w_dl=jnp.pad(params["w_dl"], ((0, dl_p - dl), (0, 0))),
        b_dl=params["b_dl"],
        w_f=jnp.pad(w_f, ((0, 0), (0, df_p - df))),
        b_f=jnp.pad(b_f, ((0, 0), (0, df_p - df))),
    )


@functools.partial(jax.jit,
                   static_argnames=("df", "tm", "tn", "compute_dtype"))
def dual_encoder_forward(hw, hl, kp, *, df, tm=128, tn=256,
                         compute_dtype=jnp.float32):
    B, dw = hw.shape
    _, dl = hl.shape
    dw_p, bneck = kp["w_dw"].shape
    dl_p = kp["w_dl"].shape[0]
    df_p = kp["w_f"].shape[1]
    out_dtype = hw.dtype

    assert dw_p % 128 == 0 and dl_p % 128 == 0
    assert dw_p >= dw and dl_p >= dl and df_p >= df
    assert tm % 8 == 0 and tn % 128 == 0 and df_p % tn == 0
    assert kp["w_f"].shape[0] == 2 * bneck

    # Pad batch to the row tile and features to the padded weight widths.
    B_p = _round_up(B, tm)
    hw_p = jnp.pad(hw, ((0, B_p - B), (0, dw_p - dw))).astype(compute_dtype)
    hl_p = jnp.pad(hl, ((0, B_p - B), (0, dl_p - dl))).astype(compute_dtype)

    grid = (B_p // tm, df_p // tn)

    out_p = pl.pallas_call(
        dual_encoder_kernel,
        out_shape=jax.ShapeDtypeStruct((B_p, df_p), out_dtype),
        grid_spec=pltpu.PrefetchScalarGridSpec(
            num_scalar_prefetch=0,
            grid=grid,
            in_specs=[
                pl.BlockSpec((tm, dw_p), lambda i, j: (i, 0)),       # hw
                pl.BlockSpec((tm, dl_p), lambda i, j: (i, 0)),       # hl
                pl.BlockSpec((dw_p, bneck), lambda i, j: (0, 0)),    # w_dw
                pl.BlockSpec((1, bneck), lambda i, j: (0, 0)),       # b_dw
                pl.BlockSpec((dl_p, bneck), lambda i, j: (0, 0)),    # w_dl
                pl.BlockSpec((1, bneck), lambda i, j: (0, 0)),       # b_dl
                pl.BlockSpec((2 * bneck, tn), lambda i, j: (0, j)),  # w_f
                pl.BlockSpec((1, tn), lambda i, j: (0, j)),          # b_f
            ],
            out_specs=pl.BlockSpec((tm, tn), lambda i, j: (i, j)),
            scratch_shapes=[pltpu.VMEM((tm, 2 * bneck), compute_dtype)],
        ),
        compiler_params=pltpu.CompilerParams(
            dimension_semantics=("parallel", "arbitrary")),
    )(hw_p, hl_p,
      kp["w_dw"].astype(compute_dtype), kp["b_dw"].astype(jnp.float32),
      kp["w_dl"].astype(compute_dtype), kp["b_dl"].astype(jnp.float32),
      kp["w_f"].astype(compute_dtype), kp["b_f"].astype(jnp.float32))

    return out_p[:B, :df]


def dual_encoder_ref(hw, hl, params):
    """Pure-JAX reference matching the PyTorch forward (unfused weights)."""
    zw = jnp.maximum(hw @ params["w_dw"] + params["b_dw"], 0.0)
    aw = zw @ params["w_uw"] + params["b_uw"]
    zl = jnp.maximum(hl @ params["w_dl"] + params["b_dl"], 0.0)
    al = zl @ params["w_ul"] + params["b_ul"]
    cat = jnp.concatenate([aw, al], axis=-1)
    w_p = jnp.concatenate([params["w_pw"], params["w_pl"]], axis=0)
    return cat @ w_p + params["b_p"]


if __name__ == "__main__":
    # dl=96 exercises the 96 -> 128 lane padding; B=256 / tm=128 gives two
    # "parallel" row tiles (megacore); df=512 / tn=256 gives two df tiles so
    # the z-scratch reuse path is exercised as well.
    B, dw, dl, df, bneck = 256, 128, 96, 512, 64
    tm, tn = 128, 256

    key = jax.random.PRNGKey(0)
    k_hw, k_hl, k_params = jax.random.split(key, 3)
    hw = jax.random.normal(k_hw, (B, dw), jnp.float32)
    hl = jax.random.normal(k_hl, (B, dl), jnp.float32)
    params = init_dual_encoder_params(k_params, dw, dl, df=df, bottleneck=bneck)

    # One-time fusion of up->proj + feature padding (host side, outside jit).
    kp = prepare_kernel_params(params, tn=tn)

    # f32 end-to-end so the strict reference check holds; pass
    # compute_dtype=jnp.bfloat16 on v6e/v7x for MXU-rate matmuls (f32 accum).
    out = dual_encoder_forward(hw, hl, kp, df=df, tm=tm, tn=tn,
                               compute_dtype=jnp.float32)
    out = jax.block_until_ready(out)

    ref = dual_encoder_ref(hw, hl, params)
    assert out.shape == (B, df), out.shape
    max_err = float(jnp.max(jnp.abs(out - ref)))
    assert jnp.allclose(out, ref, atol=1e-3, rtol=1e-3), max_err

    print("KERNEL_OK")
</pallas_src>

<mosaic_0001>
module attributes {stable_mosaic.version = 11 : i64} {
  func.func @dual_encoder_kernel(%arg0: i32, %arg1: i32, %arg2: memref<128x128xf32, #tpu.memory_space<vmem>>, %arg3: memref<128x128xf32, #tpu.memory_space<vmem>>, %arg4: memref<128x64xf32, #tpu.memory_space<vmem>>, %arg5: memref<1x64xf32, #tpu.memory_space<vmem>>, %arg6: memref<128x64xf32, #tpu.memory_space<vmem>>, %arg7: memref<1x64xf32, #tpu.memory_space<vmem>>, %arg8: memref<128x256xf32, #tpu.memory_space<vmem>>, %arg9: memref<1x256xf32, #tpu.memory_space<vmem>>, %arg10: memref<128x256xf32, #tpu.memory_space<vmem>>, %arg11: memref<128x128xf32, #tpu.memory_space<vmem>>) attributes {dimension_semantics = [#tpu.dimension_semantics<parallel>, #tpu.dimension_semantics<arbitrary>], iteration_bounds = array<i64: 2, 2>, scalar_prefetch = 0 : i64, scratch_operands = 1 : i64, tpu.core_type = #tpu.core_type<tc>, window_params = [{transform_indices = @transform_0, window_bounds = array<i64: 128, 128>}, {transform_indices = @transform_1, window_bounds = array<i64: 128, 128>}, {pipeline_mode = #tpu.pipeline_mode<synchronous>, transform_indices = @transform_2, window_bounds = array<i64: 128, 64>}, {pipeline_mode = #tpu.pipeline_mode<synchronous>, transform_indices = @transform_3, window_bounds = array<i64: 1, 64>}, {pipeline_mode = #tpu.pipeline_mode<synchronous>, transform_indices = @transform_4, window_bounds = array<i64: 128, 64>}, {pipeline_mode = #tpu.pipeline_mode<synchronous>, transform_indices = @transform_5, window_bounds = array<i64: 1, 64>}, {transform_indices = @transform_6, window_bounds = array<i64: 128, 256>}, {transform_indices = @transform_7, window_bounds = array<i64: 1, 256>}, {transform_indices = @transform_8, window_bounds = array<i64: 128, 256>}]} {
    %c0_i32 = arith.constant 0 : i32
    %0 = arith.cmpi eq, %arg1, %c0_i32 : i32
    %1 = arith.extui %0 : i1 to i32
    %c0_i32_0 = arith.constant 0 : i32
    %2 = arith.cmpi ne, %1, %c0_i32_0 : i32
    scf.if %2 {
      %c0_8 = arith.constant 0 : index
      %c0_9 = arith.constant 0 : index
      %10 = vector.load %arg2[%c0_8, %c0_9] : memref<128x128xf32, #tpu.memory_space<vmem>>, vector<128x128xf32>
      %c0_10 = arith.constant 0 : index
      %c0_11 = arith.constant 0 : index
      %11 = vector.load %arg4[%c0_10, %c0_11] : memref<128x64xf32, #tpu.memory_space<vmem>>, vector<128x64xf32>
      %cst_12 = arith.constant dense<0.000000e+00> : vector<128x64xf32>
      %12 = tpu.matmul %10, %11, %cst_12 {dimension_numbers = #tpu.dot_dimension_numbers<[1], [0], [0], [1], [0, 0, 1, 1], [], []>} : vector<128x128xf32>, vector<128x64xf32>, vector<128x64xf32> -> vector<128x64xf32>
      %c0_13 = arith.constant 0 : index
      %c0_14 = arith.constant 0 : index
      %13 = vector.load %arg5[%c0_13, %c0_14] : memref<1x64xf32, #tpu.memory_space<vmem>>, vector<1x64xf32>
      %14 = vector.broadcast %13 : vector<1x64xf32> to vector<128x64xf32>
      %15 = arith.addf %12, %14 : vector<128x64xf32>
      %cst_15 = arith.constant 0.000000e+00 : f32
      %16 = vector.broadcast %cst_15 : f32 to vector<128x64xf32>
      %17 = arith.maximumf %15, %16 : vector<128x64xf32>
      %c0_16 = arith.constant 0 : index
      %c0_17 = arith.constant 0 : index
      %18 = vector.load %arg3[%c0_16, %c0_17] : memref<128x128xf32, #tpu.memory_space<vmem>>, vector<128x128xf32>
      %c0_18 = arith.constant 0 : index
      %c0_19 = arith.constant 0 : index
      %19 = vector.load %arg6[%c0_18, %c0_19] : memref<128x64xf32, #tpu.memory_space<vmem>>, vector<128x64xf32>
      %cst_20 = arith.constant dense<0.000000e+00> : vector<128x64xf32>
      %20 = tpu.matmul %18, %19, %cst_20 {dimension_numbers = #tpu.dot_dimension_numbers<[1], [0], [0], [1], [0, 0, 1, 1], [], []>} : vector<128x128xf32>, vector<128x64xf32>, vector<128x64xf32> -> vector<128x64xf32>
      %c0_21 = arith.constant 0 : index
      %c0_22 = arith.constant 0 : index
      %21 = vector.load %arg7[%c0_21, %c0_22] : memref<1x64xf32, #tpu.memory_space<vmem>>, vector<1x64xf32>
      %22 = vector.broadcast %21 : vector<1x64xf32> to vector<128x64xf32>
      %23 = arith.addf %20, %22 : vector<128x64xf32>
      %cst_23 = arith.constant 0.000000e+00 : f32
      %24 = vector.broadcast %cst_23 : f32 to vector<128x64xf32>
      %25 = arith.maximumf %23, %24 : vector<128x64xf32>
      %26 = tpu.concatenate %17, %25 in 1 : vector<128x64xf32>, vector<128x64xf32> -> vector<128x128xf32>
      %c0_24 = arith.constant 0 : index
      %c0_25 = arith.constant 0 : index
      %27 = vector.load %arg11[%c0_24, %c0_25] : memref<128x128xf32, #tpu.memory_space<vmem>>, vector<128x128xf32>
      tpu.vector_store %arg11[%c0_24, %c0_25], %26 {strides = array<i32>} : memref<128x128xf32, #tpu.memory_space<vmem>>, vector<128x128xf32>,
    } else {
    }
    %c0 = arith.constant 0 : index
    %c0_1 = arith.constant 0 : index
    %3 = vector.load %arg11[%c0, %c0_1] : memref<128x128xf32, #tpu.memory_space<vmem>>, vector<128x128xf32>
    %c0_2 = arith.constant 0 : index
    %c0_3 = arith.constant 0 : index
    %4 = vector.load %arg8[%c0_2, %c0_3] : memref<128x256xf32, #tpu.memory_space<vmem>>, vector<128x256xf32>
    %cst = arith.constant dense<0.000000e+00> : vector<128x256xf32>
    %5 = tpu.matmul %3, %4, %cst {dimension_numbers = #tpu.dot_dimension_numbers<[1], [0], [0], [1], [0, 0, 1, 1], [], []>} : vector<128x128xf32>, vector<128x256xf32>, vector<128x256xf32> -> vector<128x256xf32>
    %c0_4 = arith.constant 0 : index
    %c0_5 = arith.constant 0 : index
    %6 = vector.load %arg9[%c0_4, %c0_5] : memref<1x256xf32, #tpu.memory_space<vmem>>, vector<1x256xf32>
    %7 = vector.broadcast %6 : vector<1x256xf32> to vector<128x256xf32>
    %8 = arith.addf %5, %7 : vector<128x256xf32>
    %c0_6 = arith.constant 0 : index
    %c0_7 = arith.constant 0 : index
    %9 = vector.load %arg10[%c0_6, %c0_7] : memref<128x256xf32, #tpu.memory_space<vmem>>, vector<128x256xf32>
    tpu.vector_store %arg10[%c0_6, %c0_7], %8 {strides = array<i32>} : memref<128x256xf32, #tpu.memory_space<vmem>>, vector<128x256xf32>,
    return
  }
  func.func @transform_0(%arg0: i32, %arg1: i32) -> (i32, i32) {
    %c0_i32 = arith.constant 0 : i32
    %c0_i32_0 = arith.constant 0 : i32
    return %arg0, %c0_i32 : i32, i32
  }
  func.func @transform_1(%arg0: i32, %arg1: i32) -> (i32, i32) {
    %c0_i32 = arith.constant 0 : i32
    %c0_i32_0 = arith.constant 0 : i32
    return %arg0, %c0_i32 : i32, i32
  }
  func.func @transform_2(%arg0: i32, %arg1: i32) -> (i32, i32) {
    %c0_i32 = arith.constant 0 : i32
    %c0_i32_0 = arith.constant 0 : i32
    %c0_i32_1 = arith.constant 0 : i32
    return %c0_i32, %c0_i32_0 : i32, i32
  }
  func.func @transform_3(%arg0: i32, %arg1: i32) -> (i32, i32) {
    %c0_i32 = arith.constant 0 : i32
    %c0_i32_0 = arith.constant 0 : i32
    %c0_i32_1 = arith.constant 0 : i32
    return %c0_i32, %c0_i32_0 : i32, i32
  }
  func.func @transform_4(%arg0: i32, %arg1: i32) -> (i32, i32) {
    %c0_i32 = arith.constant 0 : i32
    %c0_i32_0 = arith.constant 0 : i32
    %c0_i32_1 = arith.constant 0 : i32
    return %c0_i32, %c0_i32_0 : i32, i32
  }
  func.func @transform_5(%arg0: i32, %arg1: i32) -> (i32, i32) {
    %c0_i32 = arith.constant 0 : i32
    %c0_i32_0 = arith.constant 0 : i32
    %c0_i32_1 = arith.constant 0 : i32
    return %c0_i32, %c0_i32_0 : i32, i32
  }
  func.func @transform_6(%arg0: i32, %arg1: i32) -> (i32, i32) {
    %c0_i32 = arith.constant 0 : i32
    %c0_i32_0 = arith.constant 0 : i32
    return %c0_i32, %arg1 : i32, i32
  }
  func.func @transform_7(%arg0: i32, %arg1: i32) -> (i32, i32) {
    %c0_i32 = arith.constant 0 : i32
    %c0_i32_0 = arith.constant 0 : i32
    return %c0_i32, %arg1 : i32, i32
  }
  func.func @transform_8(%arg0: i32, %arg1: i32) -> (i32, i32) {
    %c0_i32 = arith.constant 0 : i32
    return %arg0, %arg1 : i32, i32
  }
}

</mosaic_0001>

<llo_original>
// kernel: dual_encoder_forward.1
$region0: #{dual_encoder_forward.1}
  #allocation0 [shape = 'u32[]', space=smem, size = 0x4, offset = 0x4, fixed_abs, tag = 'smem constant byte address 0x4 - core index']
  #allocation1 [shape = 'u32[144,128]{1,0:T(1,128)}', space=vmem, size = 0x12000, scoped, tag = 'internal scratch']
  #allocation2 [shape = 'f32[128,128]{1,0:T(8,128)}', space=vmem, size = 0x10000, scoped, tag = 'scratch operand']
  %s0 = inlined_call_operand.vmem [shape: f32[256,128], index: 0, kind: input, shape index: {}]
  %s1 = inlined_call_operand.vmem [shape: f32[256,128], index: 1, kind: input, shape index: {}]
  %s2 = inlined_call_operand.vmem [shape: f32[128,64], index: 2, kind: input, shape index: {}]
  %s3 = inlined_call_operand.vmem [shape: f32[1,64], index: 3, kind: input, shape index: {}]
  %s4 = inlined_call_operand.vmem [shape: f32[128,64], index: 4, kind: input, shape index: {}]
  %s5 = inlined_call_operand.vmem [shape: f32[1,64], index: 5, kind: input, shape index: {}]
  %s6 = inlined_call_operand.vmem [shape: f32[128,512], index: 6, kind: input, shape index: {}]
  %s7 = inlined_call_operand.vmem [shape: f32[1,512], index: 7, kind: input, shape index: {}]
  %s8 = inlined_call_operand.hbm [shape: f32[256,512], index: 8, kind: output, shape index: {}]
  %s9 = sld [smem:[#allocation0]]
  $region92: #{dual_encoder_forward.1} parent=0
    _
  %s11 = ssub.s32 1, %s9
  %s12 = scalar_select 0, %s11, %s9
  $region1: #{dual_encoder_forward.1} parent=0
    #allocation3 [shape = 'u8[262144]{0}', space=vmem, size = 0x40000, scoped, tag = 'input window, operand 6']
    #allocation4 [shape = 'u8[262144]{0}', space=vmem, size = 0x40000, scoped, tag = 'output window, operand 0']
    #allocation5 [shape = 's32[2]{0}', space=sflag, size = 0x8, scoped, tag = 'scoped memory for dual_encoder_forward.1']
    %13 = vsyncpa [#allocation5], 0
    %s14 = scalar_lea.sflag [#allocation5], 1
    %15 = vsyncpa %s14, 0
    loop: start=0, step=1, limit=6
    $region2: #{dual_encoder_forward.1} parent=1 // loop_pre_header
      _
    $region3: #{dual_encoder_forward.1} parent=1 // loop_header
      %s17 = sphi 0, %s21
      %p18 = scmp.ge.s32.totalorder %s17, 6
      %s24 = sphi 0, %s36
      %s25 = sphi 0, %s32
      %s26 = sphi 0, %s24
      %s27 = sphi 0, %s25
      %s28 = sphi 0, %s26
      %s29 = sphi 0, %s27
      %s39 = sphi 0, %s41
      %s42 = sphi 0, %s39
      %s43 = sphi 0, %s42
      %s59 = sphi 0, %s43
      %s65 = sphi 0, %s67
      %s68 = sphi 0, %s65
      %s69 = sphi 0, %s68
      %s85 = sphi 0, %s69
      %s89 = sphi 0, %s89
      %s91 = sphi 0, %s89
      %s92 = sphi 0, %s91
      %s106 = sphi 0, %s92
      %s110 = sphi 0, %s110
      %s112 = sphi 0, %s110
      %s113 = sphi 0, %s112
      %s127 = sphi 0, %s113
      %s131 = sphi 0, %s131
      %s133 = sphi 0, %s131
      %s134 = sphi 0, %s133
      %s148 = sphi 0, %s134
      %s152 = sphi 0, %s152
      %s154 = sphi 0, %s152
      %s155 = sphi 0, %s154
      %s169 = sphi 0, %s155
      %s175 = sphi 0, %s177
      %s178 = sphi 0, %s175
      %s179 = sphi 0, %s178
      %s195 = sphi 0, %s179
      %s201 = sphi 0, %s203
      %s204 = sphi 0, %s201
      %s205 = sphi 0, %s204
      %s221 = sphi 0, %s205
      %s229 = sphi 0, %s231
      %s232 = sphi 0, %s229
      %s233 = sphi 0, %s232
      %s249 = sphi 0, %s233
    $region4: #{dual_encoder_forward.1} parent=1 // loop_header_branch
      %20 = sbr.rel (%p18) target = $region8
    $region5: #{dual_encoder_forward.1} parent=1 // loop_body
      %s22 = ssub.s32 %s17, 1
      %s23 = ssub.s32 %s17, 2
      %s30 = sadd.s32 1, %s25
      %p31 = scmp.ge.s32.totalorder %s30, 2
      %s32 = scalar_select %p31, 0, %s30
      %s33 = sadd.s32 1, %s24
      %s34 = scalar_select %p31, %s33, %s24
      %p35 = scmp.ge.s32.totalorder %s34, 2
      %s36 = scalar_select %p35, 0, %s34
      %s37 = ssub.s32 %s24, %s36
      %p38 = scmp.eq.s32.totalorder %s37, 0
      %s40 = sadd.s32 %s39, 1
      %s41 = scalar_select %p38, %s39, %s40
      %p44 = pneg %p38
      %p45 = scmp.eq.s32.totalorder %s17, 3
      %p46 = por %p44, %p45
      %p47 = scmp.ne.s32.totalorder %s39, %s42
      %p48 = scmp.eq.s32.totalorder %s17, 0
      %p49 = por %p47, %p48
      %p50 = scmp.ne.s32.totalorder %s39, %s42
      %p51 = scmp.eq.s32.totalorder %s22, 3
      %p52 = por %p50, %p51
      %p53 = scmp.ne.s32.totalorder %s42, %s43
      %p54 = scmp.eq.s32.totalorder %s22, 0
      %p55 = por %p53, %p54
      %p56 = scmp.ne.s32.totalorder %s42, %s43
      %p57 = scmp.eq.s32.totalorder %s23, 3
      %p58 = por %p56, %p57
      %p60 = scmp.ne.s32.totalorder %s43, %s59
      %p61 = scmp.eq.s32.totalorder %s23, 0
      %p62 = por %p60, %p61
      %s63 = ssub.s32 %s24, %s36
      %p64 = scmp.eq.s32.totalorder %s63, 0
      %s66 = sadd.s32 %s65, 1
      %s67 = scalar_select %p64, %s65, %s66
      %p70 = pneg %p64
      %p71 = scmp.eq.s32.totalorder %s17, 3
      %p72 = por %p70, %p71
      %p73 = scmp.ne.s32.totalorder %s65, %s68
      %p74 = scmp.eq.s32.totalorder %s17, 0
      %p75 = por %p73, %p74
      %p76 = scmp.ne.s32.totalorder %s65, %s68
      %p77 = scmp.eq.s32.totalorder %s22, 3
      %p78 = por %p76, %p77
      %p79 = scmp.ne.s32.totalorder %s68, %s69
      %p80 = scmp.eq.s32.totalorder %s22, 0
      %p81 = por %p79, %p80
      %p82 = scmp.ne.s32.totalorder %s68, %s69
      %p83 = scmp.eq.s32.totalorder %s23, 3
      %p84 = por %p82, %p83
      %p86 = scmp.ne.s32.totalorder %s69, %s85
      %p87 = scmp.eq.s32.totalorder %s23, 0
      %p88 = por %p86, %p87
      %s90 = sadd.s32 %s89, 1
      %p93 = scmp.eq.s32.totalorder %s17, 3
      %p94 = scmp.ne.s32.totalorder %s89, %s91
      %p95 = scmp.eq.s32.totalorder %s17, 0
      %p96 = por %p94, %p95
      %p97 = scmp.ne.s32.totalorder %s89, %s91
      %p98 = scmp.eq.s32.totalorder %s22, 3
      %p99 = por %p97, %p98
      %p100 = scmp.ne.s32.totalorder %s91, %s92
      %p101 = scmp.eq.s32.totalorder %s22, 0
      %p102 = por %p100, %p101
      %p103 = scmp.ne.s32.totalorder %s91, %s92
      %p104 = scmp.eq.s32.totalorder %s23, 3
      %p105 = por %p103, %p104
      %p107 = scmp.ne.s32.totalorder %s92, %s106
      %p108 = scmp.eq.s32.totalorder %s23, 0
      %p109 = por %p107, %p108
      %s111 = sadd.s32 %s110, 1
      %p114 = scmp.eq.s32.totalorder %s17, 3
      %p115 = scmp.ne.s32.totalorder %s110, %s112
      %p116 = scmp.eq.s32.totalorder %s17, 0
      %p117 = por %p115, %p116
      %p118 = scmp.ne.s32.totalorder %s110, %s112
      %p119 = scmp.eq.s32.totalorder %s22, 3
      %p120 = por %p118, %p119
      %p121 = scmp.ne.s32.totalorder %s112, %s113
      %p122 = scmp.eq.s32.totalorder %s22, 0
      %p123 = por %p121, %p122
      %p124 = scmp.ne.s32.totalorder %s112, %s113
      %p125 = scmp.eq.s32.totalorder %s23, 3
      %p126 = por %p124, %p125
      %p128 = scmp.ne.s32.totalorder %s113, %s127
      %p129 = scmp.eq.s32.totalorder %s23, 0
      %p130 = por %p128, %p129
      %s132 = sadd.s32 %s131, 1
      %p135 = scmp.eq.s32.totalorder %s17, 3
      %p136 = scmp.ne.s32.totalorder %s131, %s133
      %p137 = scmp.eq.s32.totalorder %s17, 0
      %p138 = por %p136, %p137
      %p139 = scmp.ne.s32.totalorder %s131, %s133
      %p140 = scmp.eq.s32.totalorder %s22, 3
      %p141 = por %p139, %p140
      %p142 = scmp.ne.s32.totalorder %s133, %s134
      %p143 = scmp.eq.s32.totalorder %s22, 0
      %p144 = por %p142, %p143
      %p145 = scmp.ne.s32.totalorder %s133, %s134
      %p146 = scmp.eq.s32.totalorder %s23, 3
      %p147 = por %p145, %p146
      %p149 = scmp.ne.s32.totalorder %s134, %s148
      %p150 = scmp.eq.s32.totalorder %s23, 0
      %p151 = por %p149, %p150
      %s153 = sadd.s32 %s152, 1
      %p156 = scmp.eq.s32.totalorder %s17, 3
      %p157 = scmp.ne.s32.totalorder %s152, %s154
      %p158 = scmp.eq.s32.totalorder %s17, 0
      %p159 = por %p157, %p158
      %p160 = scmp.ne.s32.totalorder %s152, %s154
      %p161 = scmp.eq.s32.totalorder %s22, 3
      %p162 = por %p160, %p161
      %p163 = scmp.ne.s32.totalorder %s154, %s155
      %p164 = scmp.eq.s32.totalorder %s22, 0
      %p165 = por %p163, %p164
      %p166 = scmp.ne.s32.totalorder %s154, %s155
      %p167 = scmp.eq.s32.totalorder %s23, 3
      %p168 = por %p166, %p167
      %p170 = scmp.ne.s32.totalorder %s155, %s169
      %p171 = scmp.eq.s32.totalorder %s23, 0
      %p172 = por %p170, %p171
      %s173 = ssub.s32 %s25, %s32
      %p174 = scmp.eq.s32.totalorder %s173, 0
      %s176 = sadd.s32 %s175, 1
      %s177 = scalar_select %p174, %s175, %s176
      %p180 = pneg %p174
      %p181 = scmp.eq.s32.totalorder %s17, 3
      %p182 = por %p180, %p181
      %p183 = scmp.ne.s32.totalorder %s175, %s178
      %p184 = scmp.eq.s32.totalorder %s17, 0
      %p185 = por %p183, %p184
      %p186 = scmp.ne.s32.totalorder %s175, %s178
      %p187 = scmp.eq.s32.totalorder %s22, 3
      %p188 = por %p186, %p187
      %p189 = scmp.ne.s32.totalorder %s178, %s179
      %p190 = scmp.eq.s32.totalorder %s22, 0
      %p191 = por %p189, %p190
      %p192 = scmp.ne.s32.totalorder %s178, %s179
      %p193 = scmp.eq.s32.totalorder %s23, 3
      %p194 = por %p192, %p193
      %p196 = scmp.ne.s32.totalorder %s179, %s195
      %p197 = scmp.eq.s32.totalorder %s23, 0
      %p198 = por %p196, %p197
      %s199 = ssub.s32 %s25, %s32
      %p200 = scmp.eq.s32.totalorder %s199, 0
      %s202 = sadd.s32 %s201, 1
      %s203 = scalar_select %p200, %s201, %s202
      %p206 = pneg %p200
      %p207 = scmp.eq.s32.totalorder %s17, 3
      %p208 = por %p206, %p207
      %p209 = scmp.ne.s32.totalorder %s201, %s204
      %p210 = scmp.eq.s32.totalorder %s17, 0
      %p211 = por %p209, %p210
      %p212 = scmp.ne.s32.totalorder %s201, %s204
      %p213 = scmp.eq.s32.totalorder %s22, 3
      %p214 = por %p212, %p213
      %p215 = scmp.ne.s32.totalorder %s204, %s205
      %p216 = scmp.eq.s32.totalorder %s22, 0
      %p217 = por %p215, %p216
      %p218 = scmp.ne.s32.totalorder %s204, %s205
      %p219 = scmp.eq.s32.totalorder %s23, 3
      %p220 = por %p218, %p219
      %p222 = scmp.ne.s32.totalorder %s205, %s221
      %p223 = scmp.eq.s32.totalorder %s23, 0
      %p224 = por %p222, %p223
      %s225 = ssub.s32 %s24, %s36
      %s226 = ssub.s32 %s25, %s32
      %s227 = sor.u32 %s225, %s226
      %p228 = scmp.eq.s32.totalorder %s227, 0
      %s230 = sadd.s32 %s229, 1
      %s231 = scalar_select %p228, %s229, %s230
      %p234 = pneg %p228
      %p235 = scmp.eq.s32.totalorder %s17, 3
      %p236 = por %p234, %p235
      %p237 = scmp.ne.s32.totalorder %s229, %s232
      %p238 = scmp.eq.s32.totalorder %s17, 0
      %p239 = por %p237, %p238
      %p240 = scmp.ne.s32.totalorder %s229, %s232
      %p241 = scmp.eq.s32.totalorder %s22, 3
      %p242 = por %p240, %p241
      %p243 = scmp.ne.s32.totalorder %s232, %s233
      %p244 = scmp.eq.s32.totalorder %s22, 0
      %p245 = por %p243, %p244
      %p246 = scmp.ne.s32.totalorder %s232, %s233
      %p247 = scmp.eq.s32.totalorder %s23, 3
      %p248 = por %p246, %p247
      %p250 = scmp.ne.s32.totalorder %s233, %s249
      %p251 = scmp.eq.s32.totalorder %s23, 0
      %p252 = por %p250, %p251
      %p253 = scmp.le.s32.totalorder 1, %s17
      %p254 = scmp.lt.s32.totalorder %s17, 5
      %p255 = pnand %p253, %p254
      %p256 = pneg %p255
      // Predicated region
      $region9: #{dual_encoder_forward.1} parent=5 // pred_check
        _
      $region10: #{dual_encoder_forward.1} parent=5 // pred_check_branch
        %258 = sbr.rel (%p255) target = $region12
      $region11: #{dual_encoder_forward.1} parent=5 // pred_region
        %s259 = ssub.s32 %s17, 1
        // Predicated region
        $region13: #{dual_encoder_forward.1} parent=11 // pred_check
          %p260 = pneg %p102
        $region14: #{dual_encoder_forward.1} parent=11 // pred_check_branch
          %262 = sbr.rel (%p260) target = $region16
        $region15: #{dual_encoder_forward.1} parent=11 // pred_region
          _
        $region16: #{dual_encoder_forward.1} parent=11 // pred_fallthru
          _
        // Predicated region
        $region17: #{dual_encoder_forward.1} parent=11 // pred_check
          %p263 = pneg %p123
        $region18: #{dual_encoder_forward.1} parent=11 // pred_check_branch
          %265 = sbr.rel (%p263) target = $region20
        $region19: #{dual_encoder_forward.1} parent=11 // pred_region
          _
        $region20: #{dual_encoder_forward.1} parent=11 // pred_fallthru
          _
        // Predicated region
        $region21: #{dual_encoder_forward.1} parent=11 // pred_check
          %p266 = pneg %p144
        $region22: #{dual_encoder_forward.1} parent=11 // pred_check_branch
          %268 = sbr.rel (%p266) target = $region24
        $region23: #{dual_encoder_forward.1} parent=11 // pred_region
          _
        $region24: #{dual_encoder_forward.1} parent=11 // pred_fallthru
          _
        // Predicated region
        $region25: #{dual_encoder_forward.1} parent=11 // pred_check
          %p269 = pneg %p165
        $region26: #{dual_encoder_forward.1} parent=11 // pred_check_branch
          %271 = sbr.rel (%p269) target = $region28
        $region27: #{dual_encoder_forward.1} parent=11 // pred_region
          _
        $region28: #{dual_encoder_forward.1} parent=11 // pred_fallthru
          _
      $region12: #{dual_encoder_forward.1} parent=5 // pred_fallthru
        _
      %p272 = scmp.lt.s32.totalorder %s17, 4
      // Predicated region
      $region29: #{dual_encoder_forward.1} parent=5 // pred_check
        %p273 = pneg %p272
      $region30: #{dual_encoder_forward.1} parent=5 // pred_check_branch
        %275 = sbr.rel (%p273) target = $region32
      $region31: #{dual_encoder_forward.1} parent=5 // pred_region
        // Predicated region
        $region33: #{dual_encoder_forward.1} parent=31 // pred_check
          %p276 = pneg %p49
        $region34: #{dual_encoder_forward.1} parent=31 // pred_check_branch
          %278 = sbr.rel (%p276) target = $region36
        $region35: #{dual_encoder_forward.1} parent=31 // pred_region
          %s279 = smul.u32 16, %s24
          %p280 = scmp.lt.s32.totalorder %s279, 31
          %s281 = scalar_select %p280, %s279, 31
          %s282 = smul.addr %s281, 8
          %s283 = scalar_lea.vmem %s0, %s282
          %s284 = smul.u32 16, %s24
        $region36: #{dual_encoder_forward.1} parent=31 // pred_fallthru
          _
        // Predicated region
        $region37: #{dual_encoder_forward.1} parent=31 // pred_check
          %p285 = pneg %p75
        $region38: #{dual_encoder_forward.1} parent=31 // pred_check_branch
          %287 = sbr.rel (%p285) target = $region40
        $region39: #{dual_encoder_forward.1} parent=31 // pred_region
          %s288 = smul.u32 16, %s24
          %p289 = scmp.lt.s32.totalorder %s288, 31
          %s290 = scalar_select %p289, %s288, 31
          %s291 = smul.addr %s290, 8
          %s292 = scalar_lea.vmem %s1, %s291
          %s293 = smul.u32 16, %s24
        $region40: #{dual_encoder_forward.1} parent=31 // pred_fallthru
          _
        // Predicated region
        $region41: #{dual_encoder_forward.1} parent=31 // pred_check
          %p294 = pneg %p185
        $region42: #{dual_encoder_forward.1} parent=31 // pred_check_branch
          %296 = sbr.rel (%p294) target = $region44
        $region43: #{dual_encoder_forward.1} parent=31 // pred_region
          %s297 = sand.u32 %s175, 1
          %s298 = sand.u32 %s175, 1
          %s299 = smul.addr %s298, 256
          %s300 = scalar_lea.vmem [#allocation3], %s299
          %s301 = smul.u32 2, %s25
          %s302 = smul.addr %s301, 8
          %s303 = scalar_lea.vmem %s6, %s302
          // Predicated region
          $region45: #{dual_encoder_forward.1} parent=43 // pred_check
            _
          $region46: #{dual_encoder_forward.1} parent=43 // pred_check_branch
            %305 = sbr.rel (0) target = $region48
          $region47: #{dual_encoder_forward.1} parent=43 // pred_region
            // Predicated region
            $region49: #{dual_encoder_forward.1} parent=47 // pred_check
              _
            $region50: #{dual_encoder_forward.1} parent=47 // pred_check_branch
              %307 = sbr.rel (0) target = $region52
            $region51: #{dual_encoder_forward.1} parent=47 // pred_region
              loop: start=0, step=1, limit=1
              $region53: #{dual_encoder_forward.1} parent=51 // loop_pre_header
                _
              $region54: #{dual_encoder_forward.1} parent=51 // loop_header
                %s309 = sphi 0, %s313
                %p310 = scmp.ge.s32.totalorder %s309, 1
                %s314 = sphi %s303, %s303
                %s315 = sphi %s300, %s300
              $region55: #{dual_encoder_forward.1} parent=51 // loop_header_branch
                %312 = sbr.rel (%p310) target = $region59
              $region56: #{dual_encoder_forward.1} parent=51 // loop_body
                %v316 = vld [vmem:[%s314] sm:$0xff]
                %317 = vst [vmem:[%s315] sm:$0xff] %v316
                %v318 = vld [vmem:[%s314 + $0x8] sm:$0xff]
                %319 = vst [vmem:[%s315 + $0x8] sm:$0xff] %v318
                %v320 = vld [vmem:[%s314 + $0x20] sm:$0xff]
                %321 = vst [vmem:[%s315 + $0x10] sm:$0xff] %v320
                %v322 = vld [vmem:[%s314 + $0x28] sm:$0xff]
                %323 = vst [vmem:[%s315 + $0x18] sm:$0xff] %v322
                %v324 = vld [vmem:[%s314 + $0x40] sm:$0xff]
                %325 = vst [vmem:[%s315 + $0x20] sm:$0xff] %v324
                %v326 = vld [vmem:[%s314 + $0x48] sm:$0xff]
                %327 = vst [vmem:[%s315 + $0x28] sm:$0xff] %v326
                %v328 = vld [vmem:[%s314 + $0x60] sm:$0xff]
                %329 = vst [vmem:[%s315 + $0x30] sm:$0xff] %v328
                %v330 = vld [vmem:[%s314 + $0x68] sm:$0xff]
                %331 = vst [vmem:[%s315 + $0x38] sm:$0xff] %v330
                %v332 = vld [vmem:[%s314 + $0x80] sm:$0xff]
                %333 = vst [vmem:[%s315 + $0x40] sm:$0xff] %v332
                %v334 = vld [vmem:[%s314 + $0x88] sm:$0xff]
                %335 = vst [vmem:[%s315 + $0x48] sm:$0xff] %v334
                %v336 = vld [vmem:[%s314 + $0xa0] sm:$0xff]
                %337 = vst [vmem:[%s315 + $0x50] sm:$0xff] %v336
                %v338 = vld [vmem:[%s314 + $0xa8] sm:$0xff]
                %339 = vst [vmem:[%s315 + $0x58] sm:$0xff] %v338
                %v340 = vld [vmem:[%s314 + $0xc0] sm:$0xff]
                %341 = vst [vmem:[%s315 + $0x60] sm:$0xff] %v340
                %v342 = vld [vmem:[%s314 + $0xc8] sm:$0xff]
                %343 = vst [vmem:[%s315 + $0x68] sm:$0xff] %v342
                %v344 = vld [vmem:[%s314 + $0xe0] sm:$0xff]
                %345 = vst [vmem:[%s315 + $0x70] sm:$0xff] %v344
                %v346 = vld [vmem:[%s314 + $0xe8] sm:$0xff]
                %347 = vst [vmem:[%s315 + $0x78] sm:$0xff] %v346
                %v348 = vld [vmem:[%s314 + $0x100] sm:$0xff]
                %349 = vst [vmem:[%s315 + $0x80] sm:$0xff] %v348
                %v350 = vld [vmem:[%s314 + $0x108] sm:$0xff]
                %351 = vst [vmem:[%s315 + $0x88] sm:$0xff] %v350
                %v352 = vld [vmem:[%s314 + $0x120] sm:$0xff]
                %353 = vst [vmem:[%s315 + $0x90] sm:$0xff] %v352
                %v354 = vld [vmem:[%s314 + $0x128] sm:$0xff]
                %355 = vst [vmem:[%s315 + $0x98] sm:$0xff] %v354
                %v356 = vld [vmem:[%s314 + $0x140] sm:$0xff]
                %357 = vst [vmem:[%s315 + $0xa0] sm:$0xff] %v356
                %v358 = vld [vmem:[%s314 + $0x148] sm:$0xff]
                %359 = vst [vmem:[%s315 + $0xa8] sm:$0xff] %v358
                %v360 = vld [vmem:[%s314 + $0x160] sm:$0xff]
                %361 = vst [vmem:[%s315 + $0xb0] sm:$0xff] %v360
                %v362 = vld [vmem:[%s314 + $0x168] sm:$0xff]
                %363 = vst [vmem:[%s315 + $0xb8] sm:$0xff] %v362
                %v364 = vld [vmem:[%s314 + $0x180] sm:$0xff]
                %365 = vst [vmem:[%s315 + $0xc0] sm:$0xff] %v364
                %v366 = vld [vmem:[%s314 + $0x188] sm:$0xff]
                %367 = vst [vmem:[%s315 + $0xc8] sm:$0xff] %v366
                %v368 = vld [vmem:[%s314 + $0x1a0] sm:$0xff]
                %369 = vst [vmem:[%s315 + $0xd0] sm:$0xff] %v368
                %v370 = vld [vmem:[%s314 + $0x1a8] sm:$0xff]
                %371 = vst [vmem:[%s315 + $0xd8] sm:$0xff] %v370
                %v372 = vld [vmem:[%s314 + $0x1c0] sm:$0xff]
                %373 = vst [vmem:[%s315 + $0xe0] sm:$0xff] %v372
                %v374 = vld [vmem:[%s314 + $0x1c8] sm:$0xff]
                %375 = vst [vmem:[%s315 + $0xe8] sm:$0xff] %v374
                %v376 = vld [vmem:[%s314 + $0x1e0] sm:$0xff]
                %377 = vst [vmem:[%s315 + $0xf0] sm:$0xff] %v376
                %v378 = vld [vmem:[%s314 + $0x1e8] sm:$0xff]
                %379 = vst [vmem:[%s315 + $0xf8] sm:$0xff] %v378
              $region57: #{dual_encoder_forward.1} parent=51 // loop_footer
                %s313 = sadd.s32 1, %s309
              $region58: #{dual_encoder_forward.1} parent=51 // loop_footer_branch
                %308 = sbr.rel target = $region54
              $region59: #{dual_encoder_forward.1} parent=51 // loop_exit
                _
            $region52: #{dual_encoder_forward.1} parent=47 // pred_fallthru
              _
            // Predicated region
            $region60: #{dual_encoder_forward.1} parent=47 // pred_check
              _
            $region61: #{dual_encoder_forward.1} parent=47 // pred_check_branch
              %381 = sbr.rel target = $region63
            $region62: #{dual_encoder_forward.1} parent=47 // pred_region
              _
            $region63: #{dual_encoder_forward.1} parent=47 // pred_fallthru
              _
          $region48: #{dual_encoder_forward.1} parent=43 // pred_fallthru
            _
          %382 = vnop
        $region44: #{dual_encoder_forward.1} parent=31 // pred_fallthru
          _
        // Predicated region
        $region64: #{dual_encoder_forward.1} parent=31 // pred_check
          %p383 = pneg %p211
        $region65: #{dual_encoder_forward.1} parent=31 // pred_check_branch
          %385 = sbr.rel (%p383) target = $region67
        $region66: #{dual_encoder_forward.1} parent=31 // pred_region
          %s386 = smul.u32 2, %s25
          %p387 = scmp.lt.s32.totalorder %s386, 3
          %s388 = scalar_select %p387, %s386, 3
          %s389 = scalar_lea.vmem %s7, %s388
          %s390 = smul.u32 2, %s25
        $region67: #{dual_encoder_forward.1} parent=31 // pred_fallthru
          _
      $region32: #{dual_encoder_forward.1} parent=5 // pred_fallthru
        _
      %p391 = scmp.le.s32.totalorder 1, %s17
      %p392 = scmp.lt.s32.totalorder %s17, 5
      %p393 = pnand %p391, %p392
      %p394 = pneg %p393
      // Predicated region
      $region68: #{dual_encoder_forward.1} parent=5 // pred_check
        _
      $region69: #{dual_encoder_forward.1} parent=5 // pred_check_branch
        %396 = sbr.rel (%p393) target = $region71
      $region70: #{dual_encoder_forward.1} parent=5 // pred_region
        %s397 = ssub.s32 %s17, 1
        %s398 = sand.u32 %s178, 1
        %s399 = sand.u32 %s178, 1
        %s400 = smul.addr %s399, 256
        %s401 = scalar_lea.vmem [#allocation3], %s400
        // Predicated region
        $region72: #{dual_encoder_forward.1} parent=70 // pred_check
          %p402 = pneg %p191
        $region73: #{dual_encoder_forward.1} parent=70 // pred_check_branch
          %404 = sbr.rel (%p402) target = $region75
        $region74: #{dual_encoder_forward.1} parent=70 // pred_region
          _
        $region75: #{dual_encoder_forward.1} parent=70 // pred_fallthru
          _
        %s405 = smul.u32 16, %s26
        %p406 = scmp.lt.s32.totalorder %s405, 31
        %s407 = scalar_select %p406, %s405, 31
        %s408 = smul.addr %s407, 8
        %s409 = scalar_lea.vmem %s0, %s408
        %p410 = pneg %p55
        %p411 = pneg %p52
        %s412 = smul.u32 16, %s26
        %p413 = scmp.lt.s32.totalorder %s412, 31
        %s414 = scalar_select %p413, %s412, 31
        %s415 = smul.addr %s414, 8
        %s416 = scalar_lea.vmem %s1, %s415
        %p417 = pneg %p81
        %p418 = pneg %p78
        %p419 = pneg %p102
        %p420 = pneg %p99
        %p421 = pneg %p123
        %p422 = pneg %p120
        %p423 = pneg %p144
        %p424 = pneg %p141
        %p425 = pneg %p165
        %p426 = pneg %p162
        %s427 = sand.u32 %s178, 1
        %s428 = sand.u32 %s178, 1
        %s429 = smul.addr %s428, 256
        %s430 = scalar_lea.vmem [#allocation3], %s429
        %p431 = pneg %p191
        %p432 = pneg %p188
        %s433 = smul.u32 2, %s27
        %p434 = scmp.lt.s32.totalorder %s433, 3
        %s435 = scalar_select %p434, %s433, 3
        %s436 = scalar_lea.vmem %s7, %s435
        %p437 = pneg %p217
        %p438 = pneg %p214
        %p439 = pneg %p245
        %p440 = pneg %p242
        %s441 = sand.u32 %s232, 1
        %s442 = scalar_lea.sflag [#allocation5], %s441
        %s443 = sand.u32 %s232, 1
        %s444 = smul.addr %s443, 256
        %s445 = scalar_lea.vmem [#allocation4], %s444
        %s446 = smul.u32 16, %s26
        %p447 = scmp.lt.s32.totalorder %s446, 31
        %s448 = scalar_select %p447, %s446, 31
        %s449 = smul.addr %s448, 8
        %s450 = scalar_lea.vmem %s0, %s449
        %s451 = smul.u32 16, %s26
        %s452 = smul.u32 16, %s26
        %p453 = scmp.lt.s32.totalorder %s452, 31
        %s454 = scalar_select %p453, %s452, 31
        %s455 = smul.addr %s454, 8
        %s456 = scalar_lea.vmem %s1, %s455
        %s457 = smul.u32 16, %s26
        %s458 = smul.u32 2, %s27
        %s459 = smul.u32 2, %s27
        %p460 = scmp.lt.s32.totalorder %s459, 3
        %s461 = scalar_select %p460, %s459, 3
        %s462 = scalar_lea.vmem %s7, %s461
        %s463 = smul.u32 2, %s27
        %s464 = smul.u32 16, %s26
        %s465 = smul.u32 2, %s27
        %p466 = scmp.eq.s32.totalorder %s27, 0
        // Predicated region
        $region76: #{dual_encoder_forward.1} parent=70 // pred_check
          %p467 = pneg %p466
        $region77: #{dual_encoder_forward.1} parent=70 // pred_check_branch
          %469 = sbr.rel (%p467) target = $region79
        $region78: #{dual_encoder_forward.1} parent=70 // pred_region
          %v470 = vld [vmem:[%s450] sm:$0xff]
          %v471 = vld [vmem:[%s450 + $0x8] sm:$0xff]
          %v472 = vld [vmem:[%s450 + $0x10] sm:$0xff]
          %v473 = vld [vmem:[%s450 + $0x18] sm:$0xff]
          %v474 = vld [vmem:[%s450 + $0x20] sm:$0xff]
          %v475 = vld [vmem:[%s450 + $0x28] sm:$0xff]
          %v476 = vld [vmem:[%s450 + $0x30] sm:$0xff]
          %v477 = vld [vmem:[%s450 + $0x38] sm:$0xff]
          %v478 = vld [vmem:[%s450 + $0x40] sm:$0xff]
          %v479 = vld [vmem:[%s450 + $0x48] sm:$0xff]
          %v480 = vld [vmem:[%s450 + $0x50] sm:$0xff]
          %v481 = vld [vmem:[%s450 + $0x58] sm:$0xff]
          %v482 = vld [vmem:[%s450 + $0x60] sm:$0xff]
          %v483 = vld [vmem:[%s450 + $0x68] sm:$0xff]
          %v484 = vld [vmem:[%s450 + $0x70] sm:$0xff]
          %v485 = vld [vmem:[%s450 + $0x78] sm:$0xff]
          %v486 = vld [vmem:[%s2] sm:$0xff]
          %v487 = vld [vmem:[%s2 + $0x8] sm:$0xff]
          %v488 = vld [vmem:[%s2 + $0x10] sm:$0xff]
          %v489 = vld [vmem:[%s2 + $0x18] sm:$0xff]
          %v490 = vld [vmem:[%s2 + $0x20] sm:$0xff]
          %v491 = vld [vmem:[%s2 + $0x28] sm:$0xff]
          %v492 = vld [vmem:[%s2 + $0x30] sm:$0xff]
          %v493 = vld [vmem:[%s2 + $0x38] sm:$0xff]
          %v494 = vld [vmem:[%s2 + $0x40] sm:$0xff]
          %v495 = vld [vmem:[%s2 + $0x48] sm:$0xff]
          %v496 = vld [vmem:[%s2 + $0x50] sm:$0xff]
          %v497 = vld [vmem:[%s2 + $0x58] sm:$0xff]
          %v498 = vld [vmem:[%s2 + $0x60] sm:$0xff]
          %v499 = vld [vmem:[%s2 + $0x68] sm:$0xff]
          %v500 = vld [vmem:[%s2 + $0x70] sm:$0xff]
          %v501 = vld [vmem:[%s2 + $0x78] sm:$0xff]
          %v502 = vld [vmem:[%s3] sm:$0x1]
          %v504 = vlaneseq
          %v505 = vshrl.u32 %v504, 7
          %v506 = vsub.s32 0, %v505
          %v507 = vrot.slane %v502, %v506
          %509 = vmatprep.subr.mxu0 0.0
          %510 = vmatpush1.msra.mxu0 %v501
          %511 = vmatprep.subr.mxu0 0.0
          %512 = vmatpush1.msra.mxu0 %v500
          %513 = vmatprep.subr.mxu0 0.0
          %514 = vmatpush1.msra.mxu0 %v499
          %515 = vmatprep.subr.mxu0 0.0
          %516 = vmatpush1.msra.mxu0 %v498
          %517 = vmatprep.subr.mxu0 0.0
          %518 = vmatpush1.msra.mxu0 %v497
          %519 = vmatprep.subr.mxu0 0.0
          %520 = vmatpush1.msra.mxu0 %v496
          %521 = vmatprep.subr.mxu0 0.0
          %522 = vmatpush1.msra.mxu0 %v495
          %523 = vmatprep.subr.mxu0 0.0
          %524 = vmatpush1.msra.mxu0 %v494
          %525 = vmatprep.subr.mxu0 0.0
          %526 = vmatpush1.msra.mxu0 %v493
          %527 = vmatprep.subr.mxu0 0.0
          %528 = vmatpush1.msra.mxu0 %v492
          %529 = vmatprep.subr.mxu0 0.0
          %530 = vmatpush1.msra.mxu0 %v491
          %531 = vmatprep.subr.mxu0 0.0
          %532 = vmatpush1.msra.mxu0 %v490
          %533 = vmatprep.subr.mxu0 0.0
          %534 = vmatpush1.msra.mxu0 %v489
          %535 = vmatprep.subr.mxu0 0.0
          %536 = vmatpush1.msra.mxu0 %v488
          %537 = vmatprep.subr.mxu0 0.0
          %538 = vmatpush1.msra.mxu0 %v487
          %539 = vmatprep.subr.mxu0 0.0
          %540 = vmatpush1.msra.mxu0 %v486
          %541 = vmatprep.subr.mxu0 0.0
          %542 = vmatpush2.msra.mxu0 0.0
          %543 = vmatprep.subr.mxu0 0.0
          %544 = vmatpush2.msra.mxu0 0.0
          %545 = vmatprep.subr.mxu0 0.0
          %546 = vmatpush2.msra.mxu0 0.0
          %547 = vmatprep.subr.mxu0 0.0
          %548 = vmatpush2.msra.mxu0 0.0
          %549 = vmatprep.subr.mxu0 0.0
          %550 = vmatpush2.msra.mxu0 0.0
          %551 = vmatprep.subr.mxu0 0.0
          %552 = vmatpush2.msra.mxu0 0.0
          %553 = vmatprep.subr.mxu0 0.0
          %554 = vmatpush2.msra.mxu0 0.0
          %555 = vmatprep.subr.mxu0 0.0
          %556 = vmatpush2.msra.mxu0 0.0
          %557 = vmatprep.subr.mxu0 0.0
          %558 = vmatpush2.msra.mxu0 0.0
          %559 = vmatprep.subr.mxu0 0.0
          %560 = vmatpush2.msra.mxu0 0.0
          %561 = vmatprep.subr.mxu0 0.0
          %562 = vmatpush2.msra.mxu0 0.0
          %563 = vmatprep.subr.mxu0 0.0
          %564 = vmatpush2.msra.mxu0 0.0
          %565 = vmatprep.subr.mxu0 0.0
          %566 = vmatpush2.msra.mxu0 0.0
          %567 = vmatprep.subr.mxu0 0.0
          %568 = vmatpush2.msra.mxu0 0.0
          %569 = vmatprep.subr.mxu0 0.0
          %570 = vmatpush2.msra.mxu0 0.0
          %571 = vmatprep.subr.mxu0 0.0
          %572 = vmatpush2.msra.mxu0 0.0
          %573 = vmatprep.mubr.f32.mxu0 0.0
          %574 = vmatmul.mubr.f32.gmra.mxu0 %v470
          %v575 = vpop.f32.mrf.mxu0
          %v576 = vadd.f32 %v507, %v575
          %v577 = vpop.f32.mrf.mxu0
          %578 = vmatprep.mubr.f32.mxu0 0.0
          %579 = vmatmul.mubr.f32.gmra.mxu0 %v471
          %v580 = vpop.f32.mrf.mxu0
          %v581 = vadd.f32 %v507, %v580
          %v582 = vpop.f32.mrf.mxu0
          %583 = vmatprep.mubr.f32.mxu0 0.0
          %584 = vmatmul.mubr.f32.gmra.mxu0 %v472
          %v585 = vpop.f32.mrf.mxu0
          %v586 = vadd.f32 %v507, %v585
          %v587 = vpop.f32.mrf.mxu0
          %588 = vmatprep.mubr.f32.mxu0 0.0
          %589 = vmatmul.mubr.f32.gmra.mxu0 %v473
          %v590 = vpop.f32.mrf.mxu0
          %v591 = vadd.f32 %v507, %v590
          %v592 = vpop.f32.mrf.mxu0
          %593 = vmatprep.mubr.f32.mxu0 0.0
          %594 = vmatmul.mubr.f32.gmra.mxu0 %v474
          %v595 = vpop.f32.mrf.mxu0
          %v596 = vadd.f32 %v507, %v595
          %v597 = vpop.f32.mrf.mxu0
          %598 = vmatprep.mubr.f32.mxu0 0.0
          %599 = vmatmul.mubr.f32.gmra.mxu0 %v475
          %v600 = vpop.f32.mrf.mxu0
          %v601 = vadd.f32 %v507, %v600
          %v602 = vpop.f32.mrf.mxu0
          %603 = vmatprep.mubr.f32.mxu0 0.0
          %604 = vmatmul.mubr.f32.gmra.mxu0 %v476
          %v605 = vpop.f32.mrf.mxu0
          %v606 = vadd.f32 %v507, %v605
          %v607 = vpop.f32.mrf.mxu0
          %608 = vmatprep.mubr.f32.mxu0 0.0
          %609 = vmatmul.mubr.f32.gmra.mxu0 %v477
          %v610 = vpop.f32.mrf.mxu0
          %v611 = vadd.f32 %v507, %v610
          %v612 = vpop.f32.mrf.mxu0
          %613 = vmatprep.mubr.f32.mxu0 0.0
          %614 = vmatmul.mubr.f32.gmra.mxu0 %v478
          %v615 = vpop.f32.mrf.mxu0
          %v616 = vadd.f32 %v507, %v615
          %v617 = vpop.f32.mrf.mxu0
          %618 = vmatprep.mubr.f32.mxu0 0.0
          %619 = vmatmul.mubr.f32.gmra.mxu0 %v479
          %v620 = vpop.f32.mrf.mxu0
          %v621 = vadd.f32 %v507, %v620
          %v622 = vpop.f32.mrf.mxu0
          %623 = vmatprep.mubr.f32.mxu0 0.0
          %624 = vmatmul.mubr.f32.gmra.mxu0 %v480
          %v625 = vpop.f32.mrf.mxu0
          %v626 = vadd.f32 %v507, %v625
          %v627 = vpop.f32.mrf.mxu0
          %628 = vmatprep.mubr.f32.mxu0 0.0
          %629 = vmatmul.mubr.f32.gmra.mxu0 %v481
          %v630 = vpop.f32.mrf.mxu0
          %v631 = vadd.f32 %v507, %v630
          %v632 = vpop.f32.mrf.mxu0
          %633 = vmatprep.mubr.f32.mxu0 0.0
          %634 = vmatmul.mubr.f32.gmra.mxu0 %v482
          %v635 = vpop.f32.mrf.mxu0
          %v636 = vadd.f32 %v507, %v635
          %v637 = vpop.f32.mrf.mxu0
          %638 = vmatprep.mubr.f32.mxu0 0.0
          %639 = vmatmul.mubr.f32.gmra.mxu0 %v483
          %v640 = vpop.f32.mrf.mxu0
          %v641 = vadd.f32 %v507, %v640
          %v642 = vpop.f32.mrf.mxu0
          %643 = vmatprep.mubr.f32.mxu0 0.0
          %644 = vmatmul.mubr.f32.gmra.mxu0 %v484
          %v645 = vpop.f32.mrf.mxu0
          %v646 = vadd.f32 %v507, %v645
          %v647 = vpop.f32.mrf.mxu0
          %648 = vmatprep.mubr.f32.mxu0 0.0
          %649 = vmatmul.mubr.f32.gmra.mxu0 %v485
          %v650 = vpop.f32.mrf.mxu0
          %v651 = vadd.f32 %v507, %v650
          %v652 = vpop.f32.mrf.mxu0
          %653 = vdwg.mxu0
          %v654 = vmax.f32 %v576, 0.0
          %v655 = vmax.f32 %v581, 0.0
          %v656 = vmax.f32 %v586, 0.0
          %v657 = vmax.f32 %v591, 0.0
          %v658 = vmax.f32 %v596, 0.0
          %v659 = vmax.f32 %v601, 0.0
          %v660 = vmax.f32 %v606, 0.0
          %v661 = vmax.f32 %v611, 0.0
          %v662 = vmax.f32 %v616, 0.0
          %v663 = vmax.f32 %v621, 0.0
          %v664 = vmax.f32 %v626, 0.0
          %v665 = vmax.f32 %v631, 0.0
          %v666 = vmax.f32 %v636, 0.0
          %v667 = vmax.f32 %v641, 0.0
          %v668 = vmax.f32 %v646, 0.0
          %v669 = vmax.f32 %v651, 0.0
          %v670 = vld [vmem:[%s456] sm:$0xff]
          %v671 = vld [vmem:[%s456 + $0x8] sm:$0xff]
          %v672 = vld [vmem:[%s456 + $0x10] sm:$0xff]
          %v673 = vld [vmem:[%s456 + $0x18] sm:$0xff]
          %v674 = vld [vmem:[%s456 + $0x20] sm:$0xff]
          %v675 = vld [vmem:[%s456 + $0x28] sm:$0xff]
          %v676 = vld [vmem:[%s456 + $0x30] sm:$0xff]
          %v677 = vld [vmem:[%s456 + $0x38] sm:$0xff]
          %v678 = vld [vmem:[%s456 + $0x40] sm:$0xff]
          %v679 = vld [vmem:[%s456 + $0x48] sm:$0xff]
          %v680 = vld [vmem:[%s456 + $0x50] sm:$0xff]
          %v681 = vld [vmem:[%s456 + $0x58] sm:$0xff]
          %v682 = vld [vmem:[%s456 + $0x60] sm:$0xff]
          %v683 = vld [vmem:[%s456 + $0x68] sm:$0xff]
          %v684 = vld [vmem:[%s456 + $0x70] sm:$0xff]
          %v685 = vld [vmem:[%s456 + $0x78] sm:$0xff]
          %v686 = vld [vmem:[%s4] sm:$0xff]
          %v687 = vld [vmem:[%s4 + $0x8] sm:$0xff]
          %v688 = vld [vmem:[%s4 + $0x10] sm:$0xff]
          %v689 = vld [vmem:[%s4 + $0x18] sm:$0xff]
          %v690 = vld [vmem:[%s4 + $0x20] sm:$0xff]
          %v691 = vld [vmem:[%s4 + $0x28] sm:$0xff]
          %v692 = vld [vmem:[%s4 + $0x30] sm:$0xff]
          %v693 = vld [vmem:[%s4 + $0x38] sm:$0xff]
          %v694 = vld [vmem:[%s4 + $0x40] sm:$0xff]
          %v695 = vld [vmem:[%s4 + $0x48] sm:$0xff]
          %v696 = vld [vmem:[%s4 + $0x50] sm:$0xff]
          %v697 = vld [vmem:[%s4 + $0x58] sm:$0xff]
          %v698 = vld [vmem:[%s4 + $0x60] sm:$0xff]
          %v699 = vld [vmem:[%s4 + $0x68] sm:$0xff]
          %v700 = vld [vmem:[%s4 + $0x70] sm:$0xff]
          %v701 = vld [vmem:[%s4 + $0x78] sm:$0xff]
          %v702 = vld [vmem:[%s5] sm:$0x1]
          %v704 = vlaneseq
          %v705 = vshrl.u32 %v704, 7
          %v706 = vsub.s32 0, %v705
          %v707 = vrot.slane %v702, %v706
          %709 = vmatprep.subr.mxu0 0.0
          %710 = vmatpush1.msra.mxu0 %v701
          %711 = vmatprep.subr.mxu0 0.0
          %712 = vmatpush1.msra.mxu0 %v700
          %713 = vmatprep.subr.mxu0 0.0
          %714 = vmatpush1.msra.mxu0 %v699
          %715 = vmatprep.subr.mxu0 0.0
          %716 = vmatpush1.msra.mxu0 %v698
          %717 = vmatprep.subr.mxu0 0.0
          %718 = vmatpush1.msra.mxu0 %v697
          %719 = vmatprep.subr.mxu0 0.0
          %720 = vmatpush1.msra.mxu0 %v696
          %721 = vmatprep.subr.mxu0 0.0
          %722 = vmatpush1.msra.mxu0 %v695
          %723 = vmatprep.subr.mxu0 0.0
          %724 = vmatpush1.msra.mxu0 %v694
          %725 = vmatprep.subr.mxu0 0.0
          %726 = vmatpush1.msra.mxu0 %v693
          %727 = vmatprep.subr.mxu0 0.0
          %728 = vmatpush1.msra.mxu0 %v692
          %729 = vmatprep.subr.mxu0 0.0
          %730 = vmatpush1.msra.mxu0 %v691
          %731 = vmatprep.subr.mxu0 0.0
          %732 = vmatpush1.msra.mxu0 %v690
          %733 = vmatprep.subr.mxu0 0.0
          %734 = vmatpush1.msra.mxu0 %v689
          %735 = vmatprep.subr.mxu0 0.0
          %736 = vmatpush1.msra.mxu0 %v688
          %737 = vmatprep.subr.mxu0 0.0
          %738 = vmatpush1.msra.mxu0 %v687
          %739 = vmatprep.subr.mxu0 0.0
          %740 = vmatpush1.msra.mxu0 %v686
          %741 = vmatprep.subr.mxu0 0.0
          %742 = vmatpush2.msra.mxu0 0.0
          %743 = vmatprep.subr.mxu0 0.0
          %744 = vmatpush2.msra.mxu0 0.0
          %745 = vmatprep.subr.mxu0 0.0
          %746 = vmatpush2.msra.mxu0 0.0
          %747 = vmatprep.subr.mxu0 0.0
          %748 = vmatpush2.msra.mxu0 0.0
          %749 = vmatprep.subr.mxu0 0.0
          %750 = vmatpush2.msra.mxu0 0.0
          %751 = vmatprep.subr.mxu0 0.0
          %752 = vmatpush2.msra.mxu0 0.0
          %753 = vmatprep.subr.mxu0 0.0
          %754 = vmatpush2.msra.mxu0 0.0
          %755 = vmatprep.subr.mxu0 0.0
          %756 = vmatpush2.msra.mxu0 0.0
          %757 = vmatprep.subr.mxu0 0.0
          %758 = vmatpush2.msra.mxu0 0.0
          %759 = vmatprep.subr.mxu0 0.0
          %760 = vmatpush2.msra.mxu0 0.0
          %761 = vmatprep.subr.mxu0 0.0
          %762 = vmatpush2.msra.mxu0 0.0
          %763 = vmatprep.subr.mxu0 0.0
          %764 = vmatpush2.msra.mxu0 0.0
          %765 = vmatprep.subr.mxu0 0.0
          %766 = vmatpush2.msra.mxu0 0.0
          %767 = vmatprep.subr.mxu0 0.0
          %768 = vmatpush2.msra.mxu0 0.0
          %769 = vmatprep.subr.mxu0 0.0
          %770 = vmatpush2.msra.mxu0 0.0
          %771 = vmatprep.subr.mxu0 0.0
          %772 = vmatpush2.msra.mxu0 0.0
          %773 = vmatprep.mubr.f32.mxu0 0.0
          %774 = vmatmul.mubr.f32.gmra.mxu0 %v670
          %v775 = vpop.f32.mrf.mxu0
          %v776 = vadd.f32 %v707, %v775
          %v777 = vpop.f32.mrf.mxu0
          %778 = vmatprep.mubr.f32.mxu0 0.0
          %779 = vmatmul.mubr.f32.gmra.mxu0 %v671
          %v780 = vpop.f32.mrf.mxu0
          %v781 = vadd.f32 %v707, %v780
          %v782 = vpop.f32.mrf.mxu0
          %783 = vmatprep.mubr.f32.mxu0 0.0
          %784 = vmatmul.mubr.f32.gmra.mxu0 %v672
          %v785 = vpop.f32.mrf.mxu0
          %v786 = vadd.f32 %v707, %v785
          %v787 = vpop.f32.mrf.mxu0
          %788 = vmatprep.mubr.f32.mxu0 0.0
          %789 = vmatmul.mubr.f32.gmra.mxu0 %v673
          %v790 = vpop.f32.mrf.mxu0
          %v791 = vadd.f32 %v707, %v790
          %v792 = vpop.f32.mrf.mxu0
          %793 = vmatprep.mubr.f32.mxu0 0.0
          %794 = vmatmul.mubr.f32.gmra.mxu0 %v674
          %v795 = vpop.f32.mrf.mxu0
          %v796 = vadd.f32 %v707, %v795
          %v797 = vpop.f32.mrf.mxu0
          %798 = vmatprep.mubr.f32.mxu0 0.0
          %799 = vmatmul.mubr.f32.gmra.mxu0 %v675
          %v800 = vpop.f32.mrf.mxu0
          %v801 = vadd.f32 %v707, %v800
          %v802 = vpop.f32.mrf.mxu0
          %803 = vmatprep.mubr.f32.mxu0 0.0
          %804 = vmatmul.mubr.f32.gmra.mxu0 %v676
          %v805 = vpop.f32.mrf.mxu0
          %v806 = vadd.f32 %v707, %v805
          %v807 = vpop.f32.mrf.mxu0
          %808 = vmatprep.mubr.f32.mxu0 0.0
          %809 = vmatmul.mubr.f32.gmra.mxu0 %v677
          %v810 = vpop.f32.mrf.mxu0
          %v811 = vadd.f32 %v707, %v810
          %v812 = vpop.f32.mrf.mxu0
          %813 = vmatprep.mubr.f32.mxu0 0.0
          %814 = vmatmul.mubr.f32.gmra.mxu0 %v678
          %v815 = vpop.f32.mrf.mxu0
          %v816 = vadd.f32 %v707, %v815
          %v817 = vpop.f32.mrf.mxu0
          %818 = vmatprep.mubr.f32.mxu0 0.0
          %819 = vmatmul.mubr.f32.gmra.mxu0 %v679
          %v820 = vpop.f32.mrf.mxu0
          %v821 = vadd.f32 %v707, %v820
          %v822 = vpop.f32.mrf.mxu0
          %823 = vmatprep.mubr.f32.mxu0 0.0
          %824 = vmatmul.mubr.f32.gmra.mxu0 %v680
          %v825 = vpop.f32.mrf.mxu0
          %v826 = vadd.f32 %v707, %v825
          %v827 = vpop.f32.mrf.mxu0
          %828 = vmatprep.mubr.f32.mxu0 0.0
          %829 = vmatmul.mubr.f32.gmra.mxu0 %v681
          %v830 = vpop.f32.mrf.mxu0
          %v831 = vadd.f32 %v707, %v830
          %v832 = vpop.f32.mrf.mxu0
          %833 = vmatprep.mubr.f32.mxu0 0.0
          %834 = vmatmul.mubr.f32.gmra.mxu0 %v682
          %v835 = vpop.f32.mrf.mxu0
          %v836 = vadd.f32 %v707, %v835
          %v837 = vpop.f32.mrf.mxu0
          %838 = vmatprep.mubr.f32.mxu0 0.0
          %839 = vmatmul.mubr.f32.gmra.mxu0 %v683
          %v840 = vpop.f32.mrf.mxu0
          %v841 = vadd.f32 %v707, %v840
          %v842 = vpop.f32.mrf.mxu0
          %843 = vmatprep.mubr.f32.mxu0 0.0
          %844 = vmatmul.mubr.f32.gmra.mxu0 %v684
          %v845 = vpop.f32.mrf.mxu0
          %v846 = vadd.f32 %v707, %v845
          %v847 = vpop.f32.mrf.mxu0
          %848 = vmatprep.mubr.f32.mxu0 0.0
          %849 = vmatmul.mubr.f32.gmra.mxu0 %v685
          %v850 = vpop.f32.mrf.mxu0
          %v851 = vadd.f32 %v707, %v850
          %v852 = vpop.f32.mrf.mxu0
          %853 = vdwg.mxu0
          %v854 = vmax.f32 %v776, 0.0
          %v855 = vmax.f32 %v781, 0.0
          %v856 = vmax.f32 %v786, 0.0
          %v857 = vmax.f32 %v791, 0.0
          %v858 = vmax.f32 %v796, 0.0
          %v859 = vmax.f32 %v801, 0.0
          %v860 = vmax.f32 %v806, 0.0
          %v861 = vmax.f32 %v811, 0.0
          %v862 = vmax.f32 %v816, 0.0
          %v863 = vmax.f32 %v821, 0.0
          %v864 = vmax.f32 %v826, 0.0
          %v865 = vmax.f32 %v831, 0.0
          %v866 = vmax.f32 %v836, 0.0
          %v867 = vmax.f32 %v841, 0.0
          %v868 = vmax.f32 %v846, 0.0
          %v869 = vmax.f32 %v851, 0.0
          %886 = vrot.lane.b32.xlu0 %v854, 64
          %v887 = vpop.permute.xlu0 %886
          %888 = vrot.lane.b32.xlu0 %v855, 64
          %v889 = vpop.permute.xlu0 %888
          %890 = vrot.lane.b32.xlu0 %v856, 64
          %v891 = vpop.permute.xlu0 %890
          %892 = vrot.lane.b32.xlu0 %v857, 64
          %v893 = vpop.permute.xlu0 %892
          %894 = vrot.lane.b32.xlu0 %v858, 64
          %v895 = vpop.permute.xlu0 %894
          %896 = vrot.lane.b32.xlu0 %v859, 64
          %v897 = vpop.permute.xlu0 %896
          %898 = vrot.lane.b32.xlu0 %v860, 64
          %v899 = vpop.permute.xlu0 %898
          %900 = vrot.lane.b32.xlu0 %v861, 64
          %v901 = vpop.permute.xlu0 %900
          %902 = vrot.lane.b32.xlu0 %v862, 64
          %v903 = vpop.permute.xlu0 %902
          %904 = vrot.lane.b32.xlu0 %v863, 64
          %v905 = vpop.permute.xlu0 %904
          %906 = vrot.lane.b32.xlu0 %v864, 64
          %v907 = vpop.permute.xlu0 %906
          %908 = vrot.lane.b32.xlu0 %v865, 64
          %v909 = vpop.permute.xlu0 %908
          %910 = vrot.lane.b32.xlu0 %v866, 64
          %v911 = vpop.permute.xlu0 %910
          %912 = vrot.lane.b32.xlu0 %v867, 64
          %v913 = vpop.permute.xlu0 %912
          %914 = vrot.lane.b32.xlu0 %v868, 64
          %v915 = vpop.permute.xlu0 %914
          %916 = vrot.lane.b32.xlu0 %v869, 64
          %v917 = vpop.permute.xlu0 %916
          %vm934 = vcmask 523264
          %v935 = vsel %vm934, %v654, %v887
          %v936 = vsel %vm934, %v655, %v889
          %v937 = vsel %vm934, %v656, %v891
          %v938 = vsel %vm934, %v657, %v893
          %v939 = vsel %vm934, %v658, %v895
          %v940 = vsel %vm934, %v659, %v897
          %v941 = vsel %vm934, %v660, %v899
          %v942 = vsel %vm934, %v661, %v901
          %v943 = vsel %vm934, %v662, %v903
          %v944 = vsel %vm934, %v663, %v905
          %v945 = vsel %vm934, %v664, %v907
          %v946 = vsel %vm934, %v665, %v909
          %v947 = vsel %vm934, %v666, %v911
          %v948 = vsel %vm934, %v667, %v913
          %v949 = vsel %vm934, %v668, %v915
          %v950 = vsel %vm934, %v669, %v917
          %951 = vst [vmem:[#allocation2] sm:$0xff] %v935
          %952 = vst [vmem:[#allocation2 + $0x8] sm:$0xff] %v936
          %953 = vst [vmem:[#allocation2 + $0x10] sm:$0xff] %v937
          %954 = vst [vmem:[#allocation2 + $0x18] sm:$0xff] %v938
          %955 = vst [vmem:[#allocation2 + $0x20] sm:$0xff] %v939
          %956 = vst [vmem:[#allocation2 + $0x28] sm:$0xff] %v940
          %957 = vst [vmem:[#allocation2 + $0x30] sm:$0xff] %v941
          %958 = vst [vmem:[#allocation2 + $0x38] sm:$0xff] %v942
          %959 = vst [vmem:[#allocation2 + $0x40] sm:$0xff] %v943
          %960 = vst [vmem:[#allocation2 + $0x48] sm:$0xff] %v944
          %961 = vst [vmem:[#allocation2 + $0x50] sm:$0xff] %v945
          %962 = vst [vmem:[#allocation2 + $0x58] sm:$0xff] %v946
          %963 = vst [vmem:[#allocation2 + $0x60] sm:$0xff] %v947
          %964 = vst [vmem:[#allocation2 + $0x68] sm:$0xff] %v948
          %965 = vst [vmem:[#allocation2 + $0x70] sm:$0xff] %v949
          %966 = vst [vmem:[#allocation2 + $0x78] sm:$0xff] %v950
        $region79: #{dual_encoder_forward.1} parent=70 // pred_fallthru
          _
        %v967 = vld [vmem:[#allocation2] sm:$0xff]
        %v968 = vld [vmem:[#allocation2 + $0x8] sm:$0xff]
        %v969 = vld [vmem:[#allocation2 + $0x10] sm:$0xff]
        %v970 = vld [vmem:[#allocation2 + $0x18] sm:$0xff]
        %v971 = vld [vmem:[#allocation2 + $0x20] sm:$0xff]
        %v972 = vld [vmem:[#allocation2 + $0x28] sm:$0xff]
        %v973 = vld [vmem:[#allocation2 + $0x30] sm:$0xff]
        %v974 = vld [vmem:[#allocation2 + $0x38] sm:$0xff]
        %v975 = vld [vmem:[#allocation2 + $0x40] sm:$0xff]
        %v976 = vld [vmem:[#allocation2 + $0x48] sm:$0xff]
        %v977 = vld [vmem:[#allocation2 + $0x50] sm:$0xff]
        %v978 = vld [vmem:[#allocation2 + $0x58] sm:$0xff]
        %v979 = vld [vmem:[#allocation2 + $0x60] sm:$0xff]
        %v980 = vld [vmem:[#allocation2 + $0x68] sm:$0xff]
        %v981 = vld [vmem:[#allocation2 + $0x70] sm:$0xff]
        %v982 = vld [vmem:[#allocation2 + $0x78] sm:$0xff]
        %v983 = vld [vmem:[%s401] sm:$0xff]
        %v984 = vld [vmem:[%s401 + $0x8] sm:$0xff]
        %v985 = vld [vmem:[%s401 + $0x10] sm:$0xff]
        %v986 = vld [vmem:[%s401 + $0x18] sm:$0xff]
        %v987 = vld [vmem:[%s401 + $0x20] sm:$0xff]
        %v988 = vld [vmem:[%s401 + $0x28] sm:$0xff]
        %v989 = vld [vmem:[%s401 + $0x30] sm:$0xff]
        %v990 = vld [vmem:[%s401 + $0x38] sm:$0xff]
        %v991 = vld [vmem:[%s401 + $0x40] sm:$0xff]
        %v992 = vld [vmem:[%s401 + $0x48] sm:$0xff]
        %v993 = vld [vmem:[%s401 + $0x50] sm:$0xff]
        %v994 = vld [vmem:[%s401 + $0x58] sm:$0xff]
        %v995 = vld [vmem:[%s401 + $0x60] sm:$0xff]
        %v996 = vld [vmem:[%s401 + $0x68] sm:$0xff]
        %v997 = vld [vmem:[%s401 + $0x70] sm:$0xff]
        %v998 = vld [vmem:[%s401 + $0x78] sm:$0xff]
        %v999 = vld [vmem:[%s401 + $0x80] sm:$0xff]
        %v1000 = vld [vmem:[%s401 + $0x88] sm:$0xff]
        %v1001 = vld [vmem:[%s401 + $0x90] sm:$0xff]
        %v1002 = vld [vmem:[%s401 + $0x98] sm:$0xff]
        %v1003 = vld [vmem:[%s401 + $0xa0] sm:$0xff]
        %v1004 = vld [vmem:[%s401 + $0xa8] sm:$0xff]
        %v1005 = vld [vmem:[%s401 + $0xb0] sm:$0xff]
        %v1006 = vld [vmem:[%s401 + $0xb8] sm:$0xff]
        %v1007 = vld [vmem:[%s401 + $0xc0] sm:$0xff]
        %v1008 = vld [vmem:[%s401 + $0xc8] sm:$0xff]
        %v1009 = vld [vmem:[%s401 + $0xd0] sm:$0xff]
        %v1010 = vld [vmem:[%s401 + $0xd8] sm:$0xff]
        %v1011 = vld [vmem:[%s401 + $0xe0] sm:$0xff]
        %v1012 = vld [vmem:[%s401 + $0xe8] sm:$0xff]
        %v1013 = vld [vmem:[%s401 + $0xf0] sm:$0xff]
        %v1014 = vld [vmem:[%s401 + $0xf8] sm:$0xff]
        %v1015 = vld [vmem:[%s462] sm:$0x3]
        %v1017 = vlaneseq
        %v1018 = vshrl.u32 %v1017, 7
        %v1019 = vsub.s32 0, %v1018
        %v1020 = vrot.slane %v1015, %v1019
        %v1021 = vlaneseq
        %v1022 = vshrl.u32 %v1021, 7
        %v1023 = vsub.s32 1, %v1022
        %v1024 = vrot.slane %v1015, %v1023
        %1027 = vmatprep.subr.mxu0 %v1014
        %1028 = vmatpush1.msra.mxu0 %v1013
        %1029 = vmatprep.subr.mxu0 %v1012
        %1030 = vmatpush1.msra.mxu0 %v1011
        %1031 = vmatprep.subr.mxu0 %v1010
        %1032 = vmatpush1.msra.mxu0 %v1009
        %1033 = vmatprep.subr.mxu0 %v1008
        %1034 = vmatpush1.msra.mxu0 %v1007
        %1035 = vmatprep.subr.mxu0 %v1006
        %1036 = vmatpush1.msra.mxu0 %v1005
        %1037 = vmatprep.subr.mxu0 %v1004
        %1038 = vmatpush1.msra.mxu0 %v1003
        %1039 = vmatprep.subr.mxu0 %v1002
        %1040 = vmatpush1.msra.mxu0 %v1001
        %1041 = vmatprep.subr.mxu0 %v1000
        %1042 = vmatpush1.msra.mxu0 %v999
        %1043 = vmatprep.subr.mxu0 %v998
        %1044 = vmatpush1.msra.mxu0 %v997
        %1045 = vmatprep.subr.mxu0 %v996
        %1046 = vmatpush1.msra.mxu0 %v995
        %1047 = vmatprep.subr.mxu0 %v994
        %1048 = vmatpush1.msra.mxu0 %v993
        %1049 = vmatprep.subr.mxu0 %v992
        %1050 = vmatpush1.msra.mxu0 %v991
        %1051 = vmatprep.subr.mxu0 %v990
        %1052 = vmatpush1.msra.mxu0 %v989
        %1053 = vmatprep.subr.mxu0 %v988
        %1054 = vmatpush1.msra.mxu0 %v987
        %1055 = vmatprep.subr.mxu0 %v986
        %1056 = vmatpush1.msra.mxu0 %v985
        %1057 = vmatprep.subr.mxu0 %v984
        %1058 = vmatpush1.msra.mxu0 %v983
        %1059 = vmatprep.subr.mxu0 0.0
        %1060 = vmatpush2.msra.mxu0 0.0
        %1061 = vmatprep.subr.mxu0 0.0
        %1062 = vmatpush2.msra.mxu0 0.0
        %1063 = vmatprep.subr.mxu0 0.0
        %1064 = vmatpush2.msra.mxu0 0.0
        %1065 = vmatprep.subr.mxu0 0.0
        %1066 = vmatpush2.msra.mxu0 0.0
        %1067 = vmatprep.subr.mxu0 0.0
        %1068 = vmatpush2.msra.mxu0 0.0
        %1069 = vmatprep.subr.mxu0 0.0
        %1070 = vmatpush2.msra.mxu0 0.0
        %1071 = vmatprep.subr.mxu0 0.0
        %1072 = vmatpush2.msra.mxu0 0.0
        %1073 = vmatprep.subr.mxu0 0.0
        %1074 = vmatpush2.msra.mxu0 0.0
        %1075 = vmatprep.subr.mxu0 0.0
        %1076 = vmatpush2.msra.mxu0 0.0
        %1077 = vmatprep.subr.mxu0 0.0
        %1078 = vmatpush2.msra.mxu0 0.0
        %1079 = vmatprep.subr.mxu0 0.0
        %1080 = vmatpush2.msra.mxu0 0.0
        %1081 = vmatprep.subr.mxu0 0.0
        %1082 = vmatpush2.msra.mxu0 0.0
        %1083 = vmatprep.subr.mxu0 0.0
        %1084 = vmatpush2.msra.mxu0 0.0
        %1085 = vmatprep.subr.mxu0 0.0
        %1086 = vmatpush2.msra.mxu0 0.0
        %1087 = vmatprep.subr.mxu0 0.0
        %1088 = vmatpush2.msra.mxu0 0.0
        %1089 = vmatprep.subr.mxu0 0.0
        %1090 = vmatpush2.msra.mxu0 0.0
        %1091 = vmatprep.mubr.f32.mxu0 0.0
        %1092 = vmatmul.mubr.f32.gmra.mxu0 %v967
        %v1093 = vpop.f32.mrf.mxu0
        %v1094 = vadd.f32 %v1020, %v1093
        %v1095 = vpop.f32.mrf.mxu0
        %v1096 = vadd.f32 %v1024, %v1095
        %1097 = vmatprep.mubr.f32.mxu0 0.0
        %1098 = vmatmul.mubr.f32.gmra.mxu0 %v968
        %v1099 = vpop.f32.mrf.mxu0
        %v1100 = vadd.f32 %v1020, %v1099
        %v1101 = vpop.f32.mrf.mxu0
        %v1102 = vadd.f32 %v1024, %v1101
        %1103 = vmatprep.mubr.f32.mxu0 0.0
        %1104 = vmatmul.mubr.f32.gmra.mxu0 %v969
        %v1105 = vpop.f32.mrf.mxu0
        %v1106 = vadd.f32 %v1020, %v1105
        %v1107 = vpop.f32.mrf.mxu0
        %v1108 = vadd.f32 %v1024, %v1107
        %1109 = vmatprep.mubr.f32.mxu0 0.0
        %1110 = vmatmul.mubr.f32.gmra.mxu0 %v970
        %v1111 = vpop.f32.mrf.mxu0
        %v1112 = vadd.f32 %v1020, %v1111
        %v1113 = vpop.f32.mrf.mxu0
        %v1114 = vadd.f32 %v1024, %v1113
        %1115 = vmatprep.mubr.f32.mxu0 0.0
        %1116 = vmatmul.mubr.f32.gmra.mxu0 %v971
        %v1117 = vpop.f32.mrf.mxu0
        %v1118 = vadd.f32 %v1020, %v1117
        %v1119 = vpop.f32.mrf.mxu0
        %v1120 = vadd.f32 %v1024, %v1119
        %1121 = vmatprep.mubr.f32.mxu0 0.0
        %1122 = vmatmul.mubr.f32.gmra.mxu0 %v972
        %v1123 = vpop.f32.mrf.mxu0
        %v1124 = vadd.f32 %v1020, %v1123
        %v1125 = vpop.f32.mrf.mxu0
        %v1126 = vadd.f32 %v1024, %v1125
        %1127 = vmatprep.mubr.f32.mxu0 0.0
        %1128 = vmatmul.mubr.f32.gmra.mxu0 %v973
        %v1129 = vpop.f32.mrf.mxu0
        %v1130 = vadd.f32 %v1020, %v1129
        %v1131 = vpop.f32.mrf.mxu0
        %v1132 = vadd.f32 %v1024, %v1131
        %1133 = vmatprep.mubr.f32.mxu0 0.0
        %1134 = vmatmul.mubr.f32.gmra.mxu0 %v974
        %v1135 = vpop.f32.mrf.mxu0
        %v1136 = vadd.f32 %v1020, %v1135
        %v1137 = vpop.f32.mrf.mxu0
        %v1138 = vadd.f32 %v1024, %v1137
        %1139 = vmatprep.mubr.f32.mxu0 0.0
        %1140 = vmatmul.mubr.f32.gmra.mxu0 %v975
        %v1141 = vpop.f32.mrf.mxu0
        %v1142 = vadd.f32 %v1020, %v1141
        %v1143 = vpop.f32.mrf.mxu0
        %v1144 = vadd.f32 %v1024, %v1143
        %1145 = vmatprep.mubr.f32.mxu0 0.0
        %1146 = vmatmul.mubr.f32.gmra.mxu0 %v976
        %v1147 = vpop.f32.mrf.mxu0
        %v1148 = vadd.f32 %v1020, %v1147
        %v1149 = vpop.f32.mrf.mxu0
        %v1150 = vadd.f32 %v1024, %v1149
        %1151 = vmatprep.mubr.f32.mxu0 0.0
        %1152 = vmatmul.mubr.f32.gmra.mxu0 %v977
        %v1153 = vpop.f32.mrf.mxu0
        %v1154 = vadd.f32 %v1020, %v1153
        %v1155 = vpop.f32.mrf.mxu0
        %v1156 = vadd.f32 %v1024, %v1155
        %1157 = vmatprep.mubr.f32.mxu0 0.0
        %1158 = vmatmul.mubr.f32.gmra.mxu0 %v978
        %v1159 = vpop.f32.mrf.mxu0
        %v1160 = vadd.f32 %v1020, %v1159
        %v1161 = vpop.f32.mrf.mxu0
        %v1162 = vadd.f32 %v1024, %v1161
        %1163 = vmatprep.mubr.f32.mxu0 0.0
        %1164 = vmatmul.mubr.f32.gmra.mxu0 %v979
        %v1165 = vpop.f32.mrf.mxu0
        %v1166 = vadd.f32 %v1020, %v1165
        %v1167 = vpop.f32.mrf.mxu0
        %v1168 = vadd.f32 %v1024, %v1167
        %1169 = vmatprep.mubr.f32.mxu0 0.0
        %1170 = vmatmul.mubr.f32.gmra.mxu0 %v980
        %v1171 = vpop.f32.mrf.mxu0
        %v1172 = vadd.f32 %v1020, %v1171
        %v1173 = vpop.f32.mrf.mxu0
        %v1174 = vadd.f32 %v1024, %v1173
        %1175 = vmatprep.mubr.f32.mxu0 0.0
        %1176 = vmatmul.mubr.f32.gmra.mxu0 %v981
        %v1177 = vpop.f32.mrf.mxu0
        %v1178 = vadd.f32 %v1020, %v1177
        %v1179 = vpop.f32.mrf.mxu0
        %v1180 = vadd.f32 %v1024, %v1179
        %1181 = vmatprep.mubr.f32.mxu0 0.0
        %1182 = vmatmul.mubr.f32.gmra.mxu0 %v982
        %v1183 = vpop.f32.mrf.mxu0
        %v1184 = vadd.f32 %v1020, %v1183
        %v1185 = vpop.f32.mrf.mxu0
        %v1186 = vadd.f32 %v1024, %v1185
        %1187 = vdwg.mxu0
        %1188 = vst [vmem:[%s445] sm:$0xff] %v1094
        %1189 = vst [vmem:[%s445 + $0x8] sm:$0xff] %v1096
        %1190 = vst [vmem:[%s445 + $0x10] sm:$0xff] %v1100
        %1191 = vst [vmem:[%s445 + $0x18] sm:$0xff] %v1102
        %1192 = vst [vmem:[%s445 + $0x20] sm:$0xff] %v1106
        %1193 = vst [vmem:[%s445 + $0x28] sm:$0xff] %v1108
        %1194 = vst [vmem:[%s445 + $0x30] sm:$0xff] %v1112
        %1195 = vst [vmem:[%s445 + $0x38] sm:$0xff] %v1114
        %1196 = vst [vmem:[%s445 + $0x40] sm:$0xff] %v1118
        %1197 = vst [vmem:[%s445 + $0x48] sm:$0xff] %v1120
        %1198 = vst [vmem:[%s445 + $0x50] sm:$0xff] %v1124
        %1199 = vst [vmem:[%s445 + $0x58] sm:$0xff] %v1126
        %1200 = vst [vmem:[%s445 + $0x60] sm:$0xff] %v1130
        %1201 = vst [vmem:[%s445 + $0x68] sm:$0xff] %v1132
        %1202 = vst [vmem:[%s445 + $0x70] sm:$0xff] %v1136
        %1203 = vst [vmem:[%s445 + $0x78] sm:$0xff] %v1138
        %1204 = vst [vmem:[%s445 + $0x80] sm:$0xff] %v1142
        %1205 = vst [vmem:[%s445 + $0x88] sm:$0xff] %v1144
        %1206 = vst [vmem:[%s445 + $0x90] sm:$0xff] %v1148
        %1207 = vst [vmem:[%s445 + $0x98] sm:$0xff] %v1150
        %1208 = vst [vmem:[%s445 + $0xa0] sm:$0xff] %v1154
        %1209 = vst [vmem:[%s445 + $0xa8] sm:$0xff] %v1156
        %1210 = vst [vmem:[%s445 + $0xb0] sm:$0xff] %v1160
        %1211 = vst [vmem:[%s445 + $0xb8] sm:$0xff] %v1162
        %1212 = vst [vmem:[%s445 + $0xc0] sm:$0xff] %v1166
        %1213 = vst [vmem:[%s445 + $0xc8] sm:$0xff] %v1168
        %1214 = vst [vmem:[%s445 + $0xd0] sm:$0xff] %v1172
        %1215 = vst [vmem:[%s445 + $0xd8] sm:$0xff] %v1174
        %1216 = vst [vmem:[%s445 + $0xe0] sm:$0xff] %v1178
        %1217 = vst [vmem:[%s445 + $0xe8] sm:$0xff] %v1180
        %1218 = vst [vmem:[%s445 + $0xf0] sm:$0xff] %v1184
        %1219 = vst [vmem:[%s445 + $0xf8] sm:$0xff] %v1186
        %s1220 = sand.u32 %s232, 1
        %s1221 = scalar_lea.sflag [#allocation5], %s1220
        %s1222 = sand.u32 %s232, 1
        %s1223 = smul.addr %s1222, 256
        %s1224 = scalar_lea.vmem [#allocation4], %s1223
        // Predicated region
        $region80: #{dual_encoder_forward.1} parent=70 // pred_check
          %p1225 = pneg %p242
        $region81: #{dual_encoder_forward.1} parent=70 // pred_check_branch
          %1227 = sbr.rel (%p1225) target = $region83
        $region82: #{dual_encoder_forward.1} parent=70 // pred_region
          %s1228 = smul.u32 16, %s26
          %s1229 = smul.u32 2, %s27
          %s1231 = ssub.s32 4096, 4096
          %1232 = vsyncadd %s1221, %s1231
          %s1233 = smul.addr %s1228, 4
          %s1234 = sadd.s32 %s1229, %s1233
          %s1235 = smul.addr %s1234, 128
          %s1236 = scalar_lea.hbm %s8, %s1235
          %s1237 = sshll.u32 %s1224, 4
          %s1238 = int_to_ptr.vmem [resolvable:$true] %s1237
          %1243 = dma.vmem_to_hbm [thread:$0]  %s1238, 4096, %s1236, %s1221, 256, 512, 16
        $region83: #{dual_encoder_forward.1} parent=70 // pred_fallthru
          _
      $region71: #{dual_encoder_forward.1} parent=5 // pred_fallthru
        _
      %p1244 = scmp.le.s32.totalorder 2, %s17
      // Predicated region
      $region84: #{dual_encoder_forward.1} parent=5 // pred_check
        %p1245 = pneg %p1244
      $region85: #{dual_encoder_forward.1} parent=5 // pred_check_branch
        %1247 = sbr.rel (%p1245) target = $region87
      $region86: #{dual_encoder_forward.1} parent=5 // pred_region
        %s1248 = ssub.s32 %s17, 2
        // Predicated region
        $region88: #{dual_encoder_forward.1} parent=86 // pred_check
          %p1249 = pneg %p248
        $region89: #{dual_encoder_forward.1} parent=86 // pred_check_branch
          %1251 = sbr.rel (%p1249) target = $region91
        $region90: #{dual_encoder_forward.1} parent=86 // pred_region
          %s1252 = sand.u32 %s233, 1
          %s1253 = scalar_lea.sflag [#allocation5], %s1252
          %s1254 = sand.u32 %s233, 1
          %s1255 = smul.addr %s1254, 256
          %s1256 = scalar_lea.vmem [#allocation4], %s1255
          %1257 = dma.done %s1253, 4096
        $region91: #{dual_encoder_forward.1} parent=86 // pred_fallthru
          _
      $region87: #{dual_encoder_forward.1} parent=5 // pred_fallthru
        _
    $region6: #{dual_encoder_forward.1} parent=1 // loop_footer
      %s21 = sadd.s32 1, %s17
    $region7: #{dual_encoder_forward.1} parent=1 // loop_footer_branch
      %16 = sbr.rel target = $region3
    $region8: #{dual_encoder_forward.1} parent=1 // loop_exit
      _
    %1258 = vsyncpa [#allocation5], 1
    %s1259 = scalar_lea.sflag [#allocation5], 1
    %1260 = vsyncpa %s1259, 1

</llo_original>
